<compile_context>
chip_gen: v7x
topology: tpu7x:2x2x1
jax: 0.10.0
libtpu: 0.0.40
codegen_flags: <defaults>
</compile_context>

<pallas_src>
import functools

import jax
import jax.numpy as jnp
from jax.experimental import pallas as pl
from jax.experimental.pallas import tpu as pltpu


def _resblock_kernel(x_ref, t1_ref, b1_ref, t2_ref, b2_ref, o_ref, pad_ref,
                     *, H, P, K, Nb, L):
    """Fused conv+bn+relu -> conv+bn -> residual add -> relu for Nb images.

    x_ref:   (Nb, H, L)      lane-packed input (L = W*Cin)
    t?_ref:  (K, L, L)       block-Toeplitz (BN-scale-folded) conv weights
    b?_ref:  (1, L)          lane-packed BN bias
    o_ref:   (Nb, H, L)      lane-packed output
    pad_ref: (Nb, H+2P, L)   f32 scratch, H-zero-padded conv input (reused for
                             both convolutions)
    """

    def conv(t_ref):
        acc = jnp.zeros((Nb * H, L), jnp.float32)
        for ky in range(K):  # K matmuls, contraction depth L, full lane width
            patch = pad_ref[:, ky:ky + H, :].reshape(Nb * H, L)
            acc = acc + jnp.dot(patch, t_ref[ky],
                                preferred_element_type=jnp.float32)
        return acc  # (Nb*H, L)

    # Load the input block once; it is both the conv1 source and the residual.
    x = x_ref[...].astype(jnp.float32)                       # (Nb, H, L)

    # Zero only the border rows of the pad scratch; the interior is fully
    # overwritten every step.
    pad_ref[:, 0:P, :] = jnp.zeros((Nb, P, L), jnp.float32)
    pad_ref[:, P + H:P + H + P, :] = jnp.zeros((Nb, P, L), jnp.float32)
    pad_ref[:, P:P + H, :] = x

    # --- conv1 (+ folded BN1 bias) + ReLU --------------------------------
    h1 = jnp.maximum(conv(t1_ref) + b1_ref[...], 0.0)

    # Reuse the pad scratch as the H-zero-padded conv2 input.
    pad_ref[:, P:P + H, :] = h1.reshape(Nb, H, L)

    # --- conv2 (+ folded BN2 bias) ---------------------------------------
    h2 = conv(t2_ref) + b2_ref[...]

    # --- residual + final ReLU --------------------------------------------
    out = jnp.maximum(x.reshape(Nb * H, L) + h2, 0.0)
    o_ref[...] = out.reshape(Nb, H, L).astype(o_ref.dtype)


def _fold_conv_bn_toeplitz(w, b, gamma, beta, mean, var, *, W, eps=1e-5):
    """Fold eval-mode BN into the conv and build per-ky block-Toeplitz weights.

    Returns (toeplitz, bias_lane):
      toeplitz:  (K, W*Cin, W*Cout) with W-direction zero padding baked in,
                 such that  out_row[y] = sum_ky  xrow[y+ky-P] @ toeplitz[ky]
      bias_lane: (1, W*Cout) lane-packed bias.
    """
    Cout, Cin, K, _ = w.shape
    P = K // 2
    scale = gamma / jnp.sqrt(var + eps)                       # (Cout,)
    w_f = w * scale[:, None, None, None]                      # BN scale folded
    bias = beta + (b - mean) * scale                          # (Cout,)

    w_perm = jnp.transpose(w_f, (2, 3, 1, 0))                 # (ky, kx, Cin, Cout)
    w_in = jnp.arange(W)[:, None]                             # (W, 1)
    w_out = jnp.arange(W)[None, :]                            # (1, W)
    kx = w_in - w_out + P                                     # (W, W)
    valid = (kx >= 0) & (kx < K)
    blocks = w_perm[:, jnp.clip(kx, 0, K - 1)]                # (K, W, W, Cin, Cout)
    blocks = blocks * valid[None, :, :, None, None]
    toeplitz = jnp.transpose(blocks, (0, 1, 3, 2, 4)).reshape(K, W * Cin, W * Cout)

    bias_lane = jnp.tile(bias, W).reshape(1, W * Cout)        # [w*Cout + cout]
    return toeplitz.astype(jnp.float32), bias_lane.astype(jnp.float32)


@functools.partial(jax.jit, static_argnames=("filter_size", "max_images_per_step"))
def resblock_forward(x_nchw, params, *, filter_size=3, max_images_per_step=8):
    N, C, H, W = x_nchw.shape
    K = filter_size
    P = K // 2
    L = W * C

    # Lane-pack: NCHW -> NHWC -> (N, H, W*C).  All zero padding (W via the
    # Toeplitz band structure, H inside the kernel) is handled elsewhere, so
    # no extra HBM roundtrip here.
    x = jnp.transpose(x_nchw, (0, 2, 3, 1)).reshape(N, H, L)

    t1, b1 = _fold_conv_bn_toeplitz(*params["block1"], W=W)
    t2, b2 = _fold_conv_bn_toeplitz(*params["block2"], W=W)
    Cout = params["block1"][0].shape[0]
    assert Cout == C, "residual add requires in_channels == out_channels"

    # Images per grid step: largest divisor of N that is <= max_images_per_step.
    nb = 1
    for cand in range(min(N, max_images_per_step), 0, -1):
        if N % cand == 0:
            nb = cand
            break

    kernel = functools.partial(_resblock_kernel, H=H, P=P, K=K, Nb=nb, L=L)

    out_packed = pl.pallas_call(
        kernel,
        out_shape=jax.ShapeDtypeStruct((N, H, L), x.dtype),
        grid_spec=pltpu.PrefetchScalarGridSpec(
            num_scalar_prefetch=0,
            grid=(N // nb,),
            in_specs=[
                pl.BlockSpec((nb, H, L), lambda i: (i, 0, 0)),
                pl.BlockSpec((K, L, L), lambda i: (0, 0, 0)),
                pl.BlockSpec((1, L), lambda i: (0, 0)),
                pl.BlockSpec((K, L, L), lambda i: (0, 0, 0)),
                pl.BlockSpec((1, L), lambda i: (0, 0)),
            ],
            out_specs=pl.BlockSpec((nb, H, L), lambda i: (i, 0, 0)),
            scratch_shapes=[pltpu.VMEM((nb, H + 2 * P, L), jnp.float32)],
        ),
        compiler_params=pltpu.CompilerParams(dimension_semantics=("parallel",)),
    )(x, t1, b1, t2, b2)

    # (N, H, W*C) -> NCHW
    return jnp.transpose(out_packed.reshape(N, H, W, C), (0, 3, 1, 2))


def init_params(key, in_ch, out_ch, K):
    """Deterministic synthetic parameters: (conv_w, conv_b, gamma, beta, mean, var)."""
    def conv_bn(k):
        kw, kb, kg, kbe, km, kv = jax.random.split(k, 6)
        fan_in = in_ch * K * K
        w = jax.random.normal(kw, (out_ch, in_ch, K, K), jnp.float32) / jnp.sqrt(fan_in)
        b = 0.1 * jax.random.normal(kb, (out_ch,), jnp.float32)
        gamma = 1.0 + 0.1 * jax.random.normal(kg, (out_ch,), jnp.float32)
        beta = 0.1 * jax.random.normal(kbe, (out_ch,), jnp.float32)
        mean = 0.1 * jax.random.normal(km, (out_ch,), jnp.float32)
        var = jnp.abs(jax.random.normal(kv, (out_ch,), jnp.float32)) + 0.5
        return (w, b, gamma, beta, mean, var)

    k1, k2 = jax.random.split(key)
    return {"block1": conv_bn(k1), "block2": conv_bn(k2)}


def resblock_ref(x_nchw, params, eps=1e-5):
    """Plain-JAX reference matching PyTorch eval-mode semantics."""
    def conv_bn(x, p):
        w, b, gamma, beta, mean, var = p
        y = jax.lax.conv_general_dilated(
            x, w, window_strides=(1, 1), padding="SAME",
            dimension_numbers=("NCHW", "OIHW", "NCHW"))
        y = y + b[None, :, None, None]
        y = (y - mean[None, :, None, None]) / jnp.sqrt(var + eps)[None, :, None, None]
        return y * gamma[None, :, None, None] + beta[None, :, None, None]

    h = jax.nn.relu(conv_bn(x_nchw, params["block1"]))
    h = conv_bn(h, params["block2"])
    return jax.nn.relu(x_nchw + h)


if __name__ == "__main__":
    key = jax.random.PRNGKey(0)
    kx, kp = jax.random.split(key)

    # ResBlock requires in_channels == out_channels for the residual add.
    # W * C = 128 -> the packed last dim exactly fills the 128-lane axis.
    N, C, H, W = 2, 8, 16, 16
    x = jax.random.normal(kx, (N, C, H, W), jnp.float32)
    params = init_params(kp, C, C, 3)

    out = jax.block_until_ready(resblock_forward(x, params))

    ref = resblock_ref(x, params)
    assert out.shape == (N, C, H, W)
    assert bool(jnp.allclose(out, ref, atol=1e-2, rtol=1e-2)), \
        f"max abs err {float(jnp.max(jnp.abs(out - ref)))}"

    print("KERNEL_OK")
</pallas_src>

<mosaic_0001>
module attributes {stable_mosaic.version = 11 : i64} {
  func.func @_resblock_kernel(%arg0: i32, %arg1: memref<2x16x128xf32, #tpu.memory_space<vmem>>, %arg2: memref<3x128x128xf32, #tpu.memory_space<vmem>>, %arg3: memref<1x128xf32, #tpu.memory_space<vmem>>, %arg4: memref<3x128x128xf32, #tpu.memory_space<vmem>>, %arg5: memref<1x128xf32, #tpu.memory_space<vmem>>, %arg6: memref<2x16x128xf32, #tpu.memory_space<vmem>>, %arg7: memref<2x18x128xf32, #tpu.memory_space<vmem>>) attributes {dimension_semantics = [#tpu.dimension_semantics<parallel>], iteration_bounds = array<i64: 1>, scalar_prefetch = 0 : i64, scratch_operands = 1 : i64, tpu.core_type = #tpu.core_type<tc>, window_params = [{transform_indices = @transform_0, window_bounds = array<i64: 2, 16, 128>}, {pipeline_mode = #tpu.pipeline_mode<synchronous>, transform_indices = @transform_1, window_bounds = array<i64: 3, 128, 128>}, {pipeline_mode = #tpu.pipeline_mode<synchronous>, transform_indices = @transform_2, window_bounds = array<i64: 1, 128>}, {pipeline_mode = #tpu.pipeline_mode<synchronous>, transform_indices = @transform_3, window_bounds = array<i64: 3, 128, 128>}, {pipeline_mode = #tpu.pipeline_mode<synchronous>, transform_indices = @transform_4, window_bounds = array<i64: 1, 128>}, {transform_indices = @transform_5, window_bounds = array<i64: 2, 16, 128>}]} {
    %c0 = arith.constant 0 : index
    %c0_0 = arith.constant 0 : index
    %c0_1 = arith.constant 0 : index
    %0 = vector.load %arg1[%c0, %c0_0, %c0_1] : memref<2x16x128xf32, #tpu.memory_space<vmem>>, vector<2x16x128xf32>
    %cst = arith.constant 0.000000e+00 : f32
    %1 = vector.broadcast %cst : f32 to vector<2x1x128xf32>
    %c0_2 = arith.constant 0 : index
    %c0_3 = arith.constant 0 : index
    %c0_4 = arith.constant 0 : index
    %2 = vector.load %arg7[%c0_2, %c0_3, %c0_4] : memref<2x18x128xf32, #tpu.memory_space<vmem>>, vector<2x1x128xf32>
    tpu.vector_store %arg7[%c0_2, %c0_3, %c0_4], %1 {strides = array<i32>} : memref<2x18x128xf32, #tpu.memory_space<vmem>>, vector<2x1x128xf32>,
    %cst_5 = arith.constant 0.000000e+00 : f32
    %3 = vector.broadcast %cst_5 : f32 to vector<2x1x128xf32>
    %c0_6 = arith.constant 0 : index
    %c17 = arith.constant 17 : index
    %c0_7 = arith.constant 0 : index
    %4 = vector.load %arg7[%c0_6, %c17, %c0_7] : memref<2x18x128xf32, #tpu.memory_space<vmem>>, vector<2x1x128xf32>
    tpu.vector_store %arg7[%c0_6, %c17, %c0_7], %3 {strides = array<i32>} : memref<2x18x128xf32, #tpu.memory_space<vmem>>, vector<2x1x128xf32>,
    %c0_8 = arith.constant 0 : index
    %c1 = arith.constant 1 : index
    %c0_9 = arith.constant 0 : index
    %5 = vector.load %arg7[%c0_8, %c1, %c0_9] : memref<2x18x128xf32, #tpu.memory_space<vmem>>, vector<2x16x128xf32>
    tpu.vector_store %arg7[%c0_8, %c1, %c0_9], %0 {strides = array<i32>} : memref<2x18x128xf32, #tpu.memory_space<vmem>>, vector<2x16x128xf32>,
    %cst_10 = arith.constant 0.000000e+00 : f32
    %6 = vector.broadcast %cst_10 : f32 to vector<32x128xf32>
    %c0_11 = arith.constant 0 : index
    %c0_12 = arith.constant 0 : index
    %c0_13 = arith.constant 0 : index
    %7 = vector.load %arg7[%c0_11, %c0_12, %c0_13] : memref<2x18x128xf32, #tpu.memory_space<vmem>>, vector<2x16x128xf32>
    %8 = vector.shape_cast %7 : vector<2x16x128xf32> to vector<32x128xf32>
    %c0_14 = arith.constant 0 : index
    %c0_15 = arith.constant 0 : index
    %c0_16 = arith.constant 0 : index
    %9 = vector.load %arg2[%c0_14, %c0_15, %c0_16] : memref<3x128x128xf32, #tpu.memory_space<vmem>>, vector<1x128x128xf32>
    %10 = vector.shape_cast %9 : vector<1x128x128xf32> to vector<128x128xf32>
    %cst_17 = arith.constant dense<0.000000e+00> : vector<32x128xf32>
    %11 = tpu.matmul %8, %10, %cst_17 {dimension_numbers = #tpu.dot_dimension_numbers<[1], [0], [0], [1], [0, 0, 1, 1], [], []>} : vector<32x128xf32>, vector<128x128xf32>, vector<32x128xf32> -> vector<32x128xf32>
    %12 = arith.addf %6, %11 : vector<32x128xf32>
    %c0_18 = arith.constant 0 : index
    %c1_19 = arith.constant 1 : index
    %c0_20 = arith.constant 0 : index
    %13 = vector.load %arg7[%c0_18, %c1_19, %c0_20] : memref<2x18x128xf32, #tpu.memory_space<vmem>>, vector<2x16x128xf32>
    %14 = vector.shape_cast %13 : vector<2x16x128xf32> to vector<32x128xf32>
    %c1_21 = arith.constant 1 : index
    %c0_22 = arith.constant 0 : index
    %c0_23 = arith.constant 0 : index
    %15 = vector.load %arg2[%c1_21, %c0_22, %c0_23] : memref<3x128x128xf32, #tpu.memory_space<vmem>>, vector<1x128x128xf32>
    %16 = vector.shape_cast %15 : vector<1x128x128xf32> to vector<128x128xf32>
    %cst_24 = arith.constant dense<0.000000e+00> : vector<32x128xf32>
    %17 = tpu.matmul %14, %16, %cst_24 {dimension_numbers = #tpu.dot_dimension_numbers<[1], [0], [0], [1], [0, 0, 1, 1], [], []>} : vector<32x128xf32>, vector<128x128xf32>, vector<32x128xf32> -> vector<32x128xf32>
    %18 = arith.addf %12, %17 : vector<32x128xf32>
    %c0_25 = arith.constant 0 : index
    %c2 = arith.constant 2 : index
    %c0_26 = arith.constant 0 : index
    %19 = vector.load %arg7[%c0_25, %c2, %c0_26] : memref<2x18x128xf32, #tpu.memory_space<vmem>>, vector<2x16x128xf32>
    %20 = vector.shape_cast %19 : vector<2x16x128xf32> to vector<32x128xf32>
    %c2_27 = arith.constant 2 : index
    %c0_28 = arith.constant 0 : index
    %c0_29 = arith.constant 0 : index
    %21 = vector.load %arg2[%c2_27, %c0_28, %c0_29] : memref<3x128x128xf32, #tpu.memory_space<vmem>>, vector<1x128x128xf32>
    %22 = vector.shape_cast %21 : vector<1x128x128xf32> to vector<128x128xf32>
    %cst_30 = arith.constant dense<0.000000e+00> : vector<32x128xf32>
    %23 = tpu.matmul %20, %22, %cst_30 {dimension_numbers = #tpu.dot_dimension_numbers<[1], [0], [0], [1], [0, 0, 1, 1], [], []>} : vector<32x128xf32>, vector<128x128xf32>, vector<32x128xf32> -> vector<32x128xf32>
    %24 = arith.addf %18, %23 : vector<32x128xf32>
    %c0_31 = arith.constant 0 : index
    %c0_32 = arith.constant 0 : index
    %25 = vector.load %arg3[%c0_31, %c0_32] : memref<1x128xf32, #tpu.memory_space<vmem>>, vector<1x128xf32>
    %26 = vector.broadcast %25 : vector<1x128xf32> to vector<32x128xf32>
    %27 = arith.addf %24, %26 : vector<32x128xf32>
    %cst_33 = arith.constant 0.000000e+00 : f32
    %28 = vector.broadcast %cst_33 : f32 to vector<32x128xf32>
    %29 = arith.maximumf %27, %28 : vector<32x128xf32>
    %30 = vector.shape_cast %29 : vector<32x128xf32> to vector<2x16x128xf32>
    %c0_34 = arith.constant 0 : index
    %c1_35 = arith.constant 1 : index
    %c0_36 = arith.constant 0 : index
    %31 = vector.load %arg7[%c0_34, %c1_35, %c0_36] : memref<2x18x128xf32, #tpu.memory_space<vmem>>, vector<2x16x128xf32>
    tpu.vector_store %arg7[%c0_34, %c1_35, %c0_36], %30 {strides = array<i32>} : memref<2x18x128xf32, #tpu.memory_space<vmem>>, vector<2x16x128xf32>,
    %cst_37 = arith.constant 0.000000e+00 : f32
    %32 = vector.broadcast %cst_37 : f32 to vector<32x128xf32>
    %c0_38 = arith.constant 0 : index
    %c0_39 = arith.constant 0 : index
    %c0_40 = arith.constant 0 : index
    %33 = vector.load %arg7[%c0_38, %c0_39, %c0_40] : memref<2x18x128xf32, #tpu.memory_space<vmem>>, vector<2x16x128xf32>
    %34 = vector.shape_cast %33 : vector<2x16x128xf32> to vector<32x128xf32>
    %c0_41 = arith.constant 0 : index
    %c0_42 = arith.constant 0 : index
    %c0_43 = arith.constant 0 : index
    %35 = vector.load %arg4[%c0_41, %c0_42, %c0_43] : memref<3x128x128xf32, #tpu.memory_space<vmem>>, vector<1x128x128xf32>
    %36 = vector.shape_cast %35 : vector<1x128x128xf32> to vector<128x128xf32>
    %cst_44 = arith.constant dense<0.000000e+00> : vector<32x128xf32>
    %37 = tpu.matmul %34, %36, %cst_44 {dimension_numbers = #tpu.dot_dimension_numbers<[1], [0], [0], [1], [0, 0, 1, 1], [], []>} : vector<32x128xf32>, vector<128x128xf32>, vector<32x128xf32> -> vector<32x128xf32>
    %38 = arith.addf %32, %37 : vector<32x128xf32>
    %c0_45 = arith.constant 0 : index
    %c1_46 = arith.constant 1 : index
    %c0_47 = arith.constant 0 : index
    %39 = vector.load %arg7[%c0_45, %c1_46, %c0_47] : memref<2x18x128xf32, #tpu.memory_space<vmem>>, vector<2x16x128xf32>
    %40 = vector.shape_cast %39 : vector<2x16x128xf32> to vector<32x128xf32>
    %c1_48 = arith.constant 1 : index
    %c0_49 = arith.constant 0 : index
    %c0_50 = arith.constant 0 : index
    %41 = vector.load %arg4[%c1_48, %c0_49, %c0_50] : memref<3x128x128xf32, #tpu.memory_space<vmem>>, vector<1x128x128xf32>
    %42 = vector.shape_cast %41 : vector<1x128x128xf32> to vector<128x128xf32>
    %cst_51 = arith.constant dense<0.000000e+00> : vector<32x128xf32>
    %43 = tpu.matmul %40, %42, %cst_51 {dimension_numbers = #tpu.dot_dimension_numbers<[1], [0], [0], [1], [0, 0, 1, 1], [], []>} : vector<32x128xf32>, vector<128x128xf32>, vector<32x128xf32> -> vector<32x128xf32>
    %44 = arith.addf %38, %43 : vector<32x128xf32>
    %c0_52 = arith.constant 0 : index
    %c2_53 = arith.constant 2 : index
    %c0_54 = arith.constant 0 : index
    %45 = vector.load %arg7[%c0_52, %c2_53, %c0_54] : memref<2x18x128xf32, #tpu.memory_space<vmem>>, vector<2x16x128xf32>
    %46 = vector.shape_cast %45 : vector<2x16x128xf32> to vector<32x128xf32>
    %c2_55 = arith.constant 2 : index
    %c0_56 = arith.constant 0 : index
    %c0_57 = arith.constant 0 : index
    %47 = vector.load %arg4[%c2_55, %c0_56, %c0_57] : memref<3x128x128xf32, #tpu.memory_space<vmem>>, vector<1x128x128xf32>
    %48 = vector.shape_cast %47 : vector<1x128x128xf32> to vector<128x128xf32>
    %cst_58 = arith.constant dense<0.000000e+00> : vector<32x128xf32>
    %49 = tpu.matmul %46, %48, %cst_58 {dimension_numbers = #tpu.dot_dimension_numbers<[1], [0], [0], [1], [0, 0, 1, 1], [], []>} : vector<32x128xf32>, vector<128x128xf32>, vector<32x128xf32> -> vector<32x128xf32>
    %50 = arith.addf %44, %49 : vector<32x128xf32>
    %c0_59 = arith.constant 0 : index
    %c0_60 = arith.constant 0 : index
    %51 = vector.load %arg5[%c0_59, %c0_60] : memref<1x128xf32, #tpu.memory_space<vmem>>, vector<1x128xf32>
    %52 = vector.broadcast %51 : vector<1x128xf32> to vector<32x128xf32>
    %53 = arith.addf %50, %52 : vector<32x128xf32>
    %54 = vector.shape_cast %0 : vector<2x16x128xf32> to vector<32x128xf32>
    %55 = arith.addf %54, %53 : vector<32x128xf32>
    %cst_61 = arith.constant 0.000000e+00 : f32
    %56 = vector.broadcast %cst_61 : f32 to vector<32x128xf32>
    %57 = arith.maximumf %55, %56 : vector<32x128xf32>
    %58 = vector.shape_cast %57 : vector<32x128xf32> to vector<2x16x128xf32>
    %c0_62 = arith.constant 0 : index
    %c0_63 = arith.constant 0 : index
    %c0_64 = arith.constant 0 : index
    %59 = vector.load %arg6[%c0_62, %c0_63, %c0_64] : memref<2x16x128xf32, #tpu.memory_space<vmem>>, vector<2x16x128xf32>
    tpu.vector_store %arg6[%c0_62, %c0_63, %c0_64], %58 {strides = array<i32>} : memref<2x16x128xf32, #tpu.memory_space<vmem>>, vector<2x16x128xf32>,
    return
  }
  func.func @transform_0(%arg0: i32) -> (i32, i32, i32) {
    %c0_i32 = arith.constant 0 : i32
    %c0_i32_0 = arith.constant 0 : i32
    %c0_i32_1 = arith.constant 0 : i32
    return %arg0, %c0_i32, %c0_i32_0 : i32, i32, i32
  }
  func.func @transform_1(%arg0: i32) -> (i32, i32, i32) {
    %c0_i32 = arith.constant 0 : i32
    %c0_i32_0 = arith.constant 0 : i32
    %c0_i32_1 = arith.constant 0 : i32
    %c0_i32_2 = arith.constant 0 : i32
    return %c0_i32, %c0_i32_0, %c0_i32_1 : i32, i32, i32
  }
  func.func @transform_2(%arg0: i32) -> (i32, i32) {
    %c0_i32 = arith.constant 0 : i32
    %c0_i32_0 = arith.constant 0 : i32
    %c0_i32_1 = arith.constant 0 : i32
    return %c0_i32, %c0_i32_0 : i32, i32
  }
  func.func @transform_3(%arg0: i32) -> (i32, i32, i32) {
    %c0_i32 = arith.constant 0 : i32
    %c0_i32_0 = arith.constant 0 : i32
    %c0_i32_1 = arith.constant 0 : i32
    %c0_i32_2 = arith.constant 0 : i32
    return %c0_i32, %c0_i32_0, %c0_i32_1 : i32, i32, i32
  }
  func.func @transform_4(%arg0: i32) -> (i32, i32) {
    %c0_i32 = arith.constant 0 : i32
    %c0_i32_0 = arith.constant 0 : i32
    %c0_i32_1 = arith.constant 0 : i32
    return %c0_i32, %c0_i32_0 : i32, i32
  }
  func.func @transform_5(%arg0: i32) -> (i32, i32, i32) {
    %c0_i32 = arith.constant 0 : i32
    %c0_i32_0 = arith.constant 0 : i32
    %c0_i32_1 = arith.constant 0 : i32
    return %arg0, %c0_i32, %c0_i32_0 : i32, i32, i32
  }
}

</mosaic_0001>

<llo_original>
// kernel: tile.13
$region0: #{tile.13}
  #allocation0 [shape = 's32[1]{0}', space=sflag, size = 0x4, scoped, tag = 'scoped memory for tile.13']
  %s0 = inlined_call_operand.vmem [shape: f32[8], index: 0, kind: input, shape index: {}]
  %s1 = inlined_call_operand.vmem [shape: f32[16,8], index: 1, kind: output, shape index: {}]
  // Predicated region
  $region2: #{tile.13} parent=0 // pred_check
    _
  $region3: #{tile.13} parent=0 // pred_check_branch
    %3 = sbr.rel (0) target = $region5
  $region4: #{tile.13} parent=0 // pred_region
    _
  $region5: #{tile.13} parent=0 // pred_fallthru
    _
  %v4 = vld [vmem:[%s0] ss:$0 sm:$0xff]
  %5 = vst [vmem:[%s1] sm:$0xff] %v4
  %s6 = scalar_lea.vmem %s1, 8
  %7 = vst [vmem:[%s6] sm:$0xff] %v4

// kernel: tile.14
$region0: #{tile.14}
  %s0 = inlined_call_operand.vmem [shape: f32[16,8], index: 0, kind: input, shape index: {}]
  %s1 = inlined_call_operand.vmem [shape: f32[1,128], index: 1, kind: output, shape index: {}]
  $region1: #{tile.14} parent=0
    #allocation0 [shape = 'u8[4096]{0}', space=vmem, size = 0x1000, scoped, tag = 'scoped mem for output reshape']
    %v2 = vld [vmem:[%s0] sm:$0x1]
    %vm3 = vcmask 64512
    %4 = vst.msk [vmem:[#allocation0] sm:$0x1] %vm3, %v2
    %s5 = scalar_lea.vmem %s0, 15
    %v6 = vld [vmem:[%s5] sm:$0x1]
    %7 = vrot.lane.b32.xlu0 %v6, 120
    %v8 = vpop.permute.xlu0 %7
    %vm9 = vcmask 1048512
    %10 = vst.msk [vmem:[#allocation0] sm:$0x1] %vm9, %v8
    %s11 = scalar_lea.vmem %s0, 14
    %v12 = vld [vmem:[%s11] sm:$0x1]
    %13 = vrot.lane.b32.xlu0 %v12, 112
    %v14 = vpop.permute.xlu0 %13
    %vm15 = vcmask 982912
    %16 = vst.msk [vmem:[#allocation0] sm:$0x1] %vm15, %v14
    %s17 = scalar_lea.vmem %s0, 13
    %v18 = vld [vmem:[%s17] sm:$0x1]
    %19 = vrot.lane.b32.xlu0 %v18, 104
    %v20 = vpop.permute.xlu0 %19
    %vm21 = vcmask 917312
    %22 = vst.msk [vmem:[#allocation0] sm:$0x1] %vm21, %v20
    %s23 = scalar_lea.vmem %s0, 12
    %v24 = vld [vmem:[%s23] sm:$0x1]
    %25 = vrot.lane.b32.xlu0 %v24, 96
    %v26 = vpop.permute.xlu0 %25
    %vm27 = vcmask 851712
    %28 = vst.msk [vmem:[#allocation0] sm:$0x1] %vm27, %v26
    %s29 = scalar_lea.vmem %s0, 11
    %v30 = vld [vmem:[%s29] sm:$0x1]
    %31 = vrot.lane.b32.xlu0 %v30, 88
    %v32 = vpop.permute.xlu0 %31
    %vm33 = vcmask 786112
    %34 = vst.msk [vmem:[#allocation0] sm:$0x1] %vm33, %v32
    %s35 = scalar_lea.vmem %s0, 10
    %v36 = vld [vmem:[%s35] sm:$0x1]
    %37 = vrot.lane.b32.xlu0 %v36, 80
    %v38 = vpop.permute.xlu0 %37
    %vm39 = vcmask 720512
    %40 = vst.msk [vmem:[#allocation0] sm:$0x1] %vm39, %v38
    %s41 = scalar_lea.vmem %s0, 9
    %v42 = vld [vmem:[%s41] sm:$0x1]
    %43 = vrot.lane.b32.xlu0 %v42, 72
    %v44 = vpop.permute.xlu0 %43
    %vm45 = vcmask 654912
    %46 = vst.msk [vmem:[#allocation0] sm:$0x1] %vm45, %v44
    %s47 = scalar_lea.vmem %s0, 8
    %v48 = vld [vmem:[%s47] sm:$0x1]
    %49 = vrot.lane.b32.xlu0 %v48, 64
    %v50 = vpop.permute.xlu0 %49
    %vm51 = vcmask 589312
    %52 = vst.msk [vmem:[#allocation0] sm:$0x1] %vm51, %v50
    %s53 = scalar_lea.vmem %s0, 7
    %v54 = vld [vmem:[%s53] sm:$0x1]
    %55 = vrot.lane.b32.xlu0 %v54, 56
    %v56 = vpop.permute.xlu0 %55
    %vm57 = vcmask 523712
    %58 = vst.msk [vmem:[#allocation0] sm:$0x1] %vm57, %v56
    %s59 = scalar_lea.vmem %s0, 6
    %v60 = vld [vmem:[%s59] sm:$0x1]
    %61 = vrot.lane.b32.xlu0 %v60, 48
    %v62 = vpop.permute.xlu0 %61
    %vm63 = vcmask 458112
    %64 = vst.msk [vmem:[#allocation0] sm:$0x1] %vm63, %v62
    %s65 = scalar_lea.vmem %s0, 5
    %v66 = vld [vmem:[%s65] sm:$0x1]
    %67 = vrot.lane.b32.xlu0 %v66, 40
    %v68 = vpop.permute.xlu0 %67
    %vm69 = vcmask 392512
    %70 = vst.msk [vmem:[#allocation0] sm:$0x1] %vm69, %v68
    %s71 = scalar_lea.vmem %s0, 4
    %v72 = vld [vmem:[%s71] sm:$0x1]
    %73 = vrot.lane.b32.xlu0 %v72, 32
    %v74 = vpop.permute.xlu0 %73
    %vm75 = vcmask 326912
    %76 = vst.msk [vmem:[#allocation0] sm:$0x1] %vm75, %v74
    %s77 = scalar_lea.vmem %s0, 3
    %v78 = vld [vmem:[%s77] sm:$0x1]
    %79 = vrot.lane.b32.xlu0 %v78, 24
    %v80 = vpop.permute.xlu0 %79
    %vm81 = vcmask 261312
    %82 = vst.msk [vmem:[#allocation0] sm:$0x1] %vm81, %v80
    %s83 = scalar_lea.vmem %s0, 2
    %v84 = vld [vmem:[%s83] sm:$0x1]
    %85 = vrot.lane.b32.xlu0 %v84, 16
    %v86 = vpop.permute.xlu0 %85
    %vm87 = vcmask 195712
    %88 = vst.msk [vmem:[#allocation0] sm:$0x1] %vm87, %v86
    %s89 = scalar_lea.vmem %s0, 1
    %v90 = vld [vmem:[%s89] sm:$0x1]
    %91 = vrot.lane.b32.xlu0 %v90, 8
    %v92 = vpop.permute.xlu0 %91
    %vm93 = vcmask 130112
    %94 = vst.msk [vmem:[#allocation0] sm:$0x1] %vm93, %v92
    %s96 = sshllo.u32 0, 1
    %v98 = vld [vmem:[#allocation0] sm:%s96]
    %s99 = sshllo.u32 0, 1
    %100 = vst [vmem:[%s1] sm:%s99] %v98

// kernel: resblock_forward.1
$region0: #{resblock_forward.1}
  #allocation0 [shape = 'u32[]', space=smem, size = 0x4, offset = 0x4, fixed_abs, tag = 'smem constant byte address 0x4 - core index']
  #allocation1 [shape = 'u32[144,128]{1,0:T(1,128)}', space=vmem, size = 0x12000, scoped, tag = 'internal scratch']
  #allocation2 [shape = 'f32[2,18,128]{2,1,0:T(8,128)}', space=vmem, size = 0x6000, scoped, tag = 'scratch operand']
  %s0 = inlined_call_operand.vmem [shape: f32[2,16,128], index: 0, kind: input, shape index: {}]
  %s1 = inlined_call_operand.vmem [shape: f32[3,128,128], index: 1, kind: input, shape index: {}]
  %s2 = inlined_call_operand.vmem [shape: f32[1,128], index: 2, kind: input, shape index: {}]
  %s3 = inlined_call_operand.vmem [shape: f32[3,128,128], index: 3, kind: input, shape index: {}]
  %s4 = inlined_call_operand.vmem [shape: f32[1,128], index: 4, kind: input, shape index: {}]
  %s5 = inlined_call_operand.vmem [shape: f32[2,16,128], index: 5, kind: output, shape index: {}]
  %s6 = sld [smem:[#allocation0]]
  $region30: #{resblock_forward.1} parent=0
    _
  %s8 = ssub.s32 1, %s6
  %s9 = scalar_select 0, %s8, %s6
  // Predicated region
  $region2: #{resblock_forward.1} parent=0 // pred_check
    _
  $region3: #{resblock_forward.1} parent=0 // pred_check_branch
    %11 = sbr.rel (0) target = $region5
  $region4: #{resblock_forward.1} parent=0 // pred_region
    _
  $region5: #{resblock_forward.1} parent=0 // pred_fallthru
    _
  // Predicated region
  $region6: #{resblock_forward.1} parent=0 // pred_check
    _
  $region7: #{resblock_forward.1} parent=0 // pred_check_branch
    %13 = sbr.rel (0) target = $region9
  $region8: #{resblock_forward.1} parent=0 // pred_region
    _
  $region9: #{resblock_forward.1} parent=0 // pred_fallthru
    _
  // Predicated region
  $region10: #{resblock_forward.1} parent=0 // pred_check
    _
  $region11: #{resblock_forward.1} parent=0 // pred_check_branch
    %15 = sbr.rel (0) target = $region13
  $region12: #{resblock_forward.1} parent=0 // pred_region
    _
  $region13: #{resblock_forward.1} parent=0 // pred_fallthru
    _
  // Predicated region
  $region14: #{resblock_forward.1} parent=0 // pred_check
    _
  $region15: #{resblock_forward.1} parent=0 // pred_check_branch
    %17 = sbr.rel (0) target = $region17
  $region16: #{resblock_forward.1} parent=0 // pred_region
    _
  $region17: #{resblock_forward.1} parent=0 // pred_fallthru
    _
  // Predicated region
  $region18: #{resblock_forward.1} parent=0 // pred_check
    _
  $region19: #{resblock_forward.1} parent=0 // pred_check_branch
    %19 = sbr.rel (0) target = $region21
  $region20: #{resblock_forward.1} parent=0 // pred_region
    _
  $region21: #{resblock_forward.1} parent=0 // pred_fallthru
    _
  %v20 = vld [vmem:[%s0] sm:$0xff]
  %v21 = vld [vmem:[%s0 + $0x8] sm:$0xff]
  %v22 = vld [vmem:[%s0 + $0x10] sm:$0xff]
  %v23 = vld [vmem:[%s0 + $0x18] sm:$0xff]
  %24 = vst [vmem:[#allocation2] sm:$0x1] 0.0
  %25 = vst [vmem:[#allocation2 + $0x18] sm:$0x1] 0.0
  %26 = vst [vmem:[#allocation2 + $0x11] sm:$0x1] 0.0
  %27 = vst [vmem:[#allocation2 + $0x29] sm:$0x1] 0.0
  %28 = vst [vmem:[#allocation2 + $0x1] sm:$0xff] %v20
  %29 = vst [vmem:[#allocation2 + $0x9] sm:$0xff] %v21
  %30 = vst [vmem:[#allocation2 + $0x19] sm:$0xff] %v22
  %31 = vst [vmem:[#allocation2 + $0x21] sm:$0xff] %v23
  %v32 = vld [vmem:[#allocation2] sm:$0xff]
  %v33 = vld [vmem:[#allocation2 + $0x8] sm:$0xff]
  %v34 = vld [vmem:[#allocation2 + $0x18] sm:$0xff]
  %v35 = vld [vmem:[#allocation2 + $0x20] sm:$0xff]
  %v36 = vld [vmem:[%s1] sm:$0xff]
  %v37 = vld [vmem:[%s1 + $0x8] sm:$0xff]
  %v38 = vld [vmem:[%s1 + $0x10] sm:$0xff]
  %v39 = vld [vmem:[%s1 + $0x18] sm:$0xff]
  %v40 = vld [vmem:[%s1 + $0x20] sm:$0xff]
  %v41 = vld [vmem:[%s1 + $0x28] sm:$0xff]
  %v42 = vld [vmem:[%s1 + $0x30] sm:$0xff]
  %v43 = vld [vmem:[%s1 + $0x38] sm:$0xff]
  %v44 = vld [vmem:[%s1 + $0x40] sm:$0xff]
  %v45 = vld [vmem:[%s1 + $0x48] sm:$0xff]
  %v46 = vld [vmem:[%s1 + $0x50] sm:$0xff]
  %v47 = vld [vmem:[%s1 + $0x58] sm:$0xff]
  %v48 = vld [vmem:[%s1 + $0x60] sm:$0xff]
  %v49 = vld [vmem:[%s1 + $0x68] sm:$0xff]
  %v50 = vld [vmem:[%s1 + $0x70] sm:$0xff]
  %v51 = vld [vmem:[%s1 + $0x78] sm:$0xff]
  %v52 = vld [vmem:[#allocation2 + $0x1] sm:$0xff]
  %v53 = vld [vmem:[#allocation2 + $0x9] sm:$0xff]
  %v54 = vld [vmem:[#allocation2 + $0x19] sm:$0xff]
  %v55 = vld [vmem:[#allocation2 + $0x21] sm:$0xff]
  %s56 = scalar_lea.vmem %s1, 128
  %v57 = vld [vmem:[%s56] sm:$0xff]
  %v58 = vld [vmem:[%s56 + $0x8] sm:$0xff]
  %v59 = vld [vmem:[%s56 + $0x10] sm:$0xff]
  %v60 = vld [vmem:[%s56 + $0x18] sm:$0xff]
  %v61 = vld [vmem:[%s56 + $0x20] sm:$0xff]
  %v62 = vld [vmem:[%s56 + $0x28] sm:$0xff]
  %v63 = vld [vmem:[%s56 + $0x30] sm:$0xff]
  %v64 = vld [vmem:[%s56 + $0x38] sm:$0xff]
  %v65 = vld [vmem:[%s56 + $0x40] sm:$0xff]
  %v66 = vld [vmem:[%s56 + $0x48] sm:$0xff]
  %v67 = vld [vmem:[%s56 + $0x50] sm:$0xff]
  %v68 = vld [vmem:[%s56 + $0x58] sm:$0xff]
  %v69 = vld [vmem:[%s56 + $0x60] sm:$0xff]
  %v70 = vld [vmem:[%s56 + $0x68] sm:$0xff]
  %v71 = vld [vmem:[%s56 + $0x70] sm:$0xff]
  %v72 = vld [vmem:[%s56 + $0x78] sm:$0xff]
  %73 = vmatprep.subr.mxu0 0.0
  %74 = vmatpush1.msra.mxu0 %v57
  %75 = vmatprep.subr.mxu0 0.0
  %76 = vmatpush1.msra.mxu0 %v58
  %77 = vmatprep.subr.mxu0 0.0
  %78 = vmatpush1.msra.mxu0 %v59
  %79 = vmatprep.subr.mxu0 0.0
  %80 = vmatpush1.msra.mxu0 %v60
  %81 = vmatprep.subr.mxu0 0.0
  %82 = vmatpush1.msra.mxu0 %v61
  %83 = vmatprep.subr.mxu0 0.0
  %84 = vmatpush1.msra.mxu0 %v62
  %85 = vmatprep.subr.mxu0 0.0
  %86 = vmatpush1.msra.mxu0 %v63
  %87 = vmatprep.subr.mxu0 0.0
  %88 = vmatpush1.msra.mxu0 %v64
  %89 = vmatprep.subr.mxu0 0.0
  %90 = vmatpush1.msra.mxu0 %v65
  %91 = vmatprep.subr.mxu0 0.0
  %92 = vmatpush1.msra.mxu0 %v66
  %93 = vmatprep.subr.mxu0 0.0
  %94 = vmatpush1.msra.mxu0 %v67
  %95 = vmatprep.subr.mxu0 0.0
  %96 = vmatpush1.msra.mxu0 %v68
  %97 = vmatprep.subr.mxu0 0.0
  %98 = vmatpush1.msra.mxu0 %v69
  %99 = vmatprep.subr.mxu0 0.0
  %100 = vmatpush1.msra.mxu0 %v70
  %101 = vmatprep.subr.mxu0 0.0
  %102 = vmatpush1.msra.mxu0 %v71
  %103 = vmatprep.subr.mxu0 0.0
  %104 = vmatpush1.msra.mxu0 %v72
  %105 = vmatprep.subr.mxu0 0.0
  %106 = vmatpush1.msra.mxu0 0.0
  %107 = vmatprep.subr.mxu0 0.0
  %108 = vmatpush1.msra.mxu0 0.0
  %109 = vmatprep.subr.mxu0 0.0
  %110 = vmatpush1.msra.mxu0 0.0
  %111 = vmatprep.subr.mxu0 0.0
  %112 = vmatpush1.msra.mxu0 0.0
  %113 = vmatprep.subr.mxu0 0.0
  %114 = vmatpush1.msra.mxu0 0.0
  %115 = vmatprep.subr.mxu0 0.0
  %116 = vmatpush1.msra.mxu0 0.0
  %117 = vmatprep.subr.mxu0 0.0
  %118 = vmatpush1.msra.mxu0 0.0
  %119 = vmatprep.subr.mxu0 0.0
  %120 = vmatpush1.msra.mxu0 0.0
  %121 = vmatprep.subr.mxu0 0.0
  %122 = vmatpush1.msra.mxu0 0.0
  %123 = vmatprep.subr.mxu0 0.0
  %124 = vmatpush1.msra.mxu0 0.0
  %125 = vmatprep.subr.mxu0 0.0
  %126 = vmatpush1.msra.mxu0 0.0
  %127 = vmatprep.subr.mxu0 0.0
  %128 = vmatpush1.msra.mxu0 0.0
  %129 = vmatprep.subr.mxu0 0.0
  %130 = vmatpush1.msra.mxu0 0.0
  %131 = vmatprep.subr.mxu0 0.0
  %132 = vmatpush1.msra.mxu0 0.0
  %133 = vmatprep.subr.mxu0 0.0
  %134 = vmatpush1.msra.mxu0 0.0
  %135 = vmatprep.subr.mxu0 0.0
  %136 = vmatpush1.msra.mxu0 0.0
  %137 = vmatprep.mubr.f32.mxu0 0.0
  %138 = vmatmul.mubr.f32.gmra.mrb[0].mxu0 %v52
  %v139 = vpop.f32.mrb[0].mxu0
  %v140 = vadd.f32 0.0, %v139
  %v141 = vpop.f32.mrb[0].mxu0
  %142 = vmatprep.mubr.f32.mxu0 0.0
  %143 = vmatmul.mubr.f32.gmra.mrb[0].mxu0 %v53
  %v144 = vpop.f32.mrb[0].mxu0
  %v145 = vadd.f32 0.0, %v144
  %v146 = vpop.f32.mrb[0].mxu0
  %147 = vmatprep.mubr.f32.mxu0 0.0
  %148 = vmatmul.mubr.f32.gmra.mrb[0].mxu0 %v54
  %v149 = vpop.f32.mrb[0].mxu0
  %v150 = vadd.f32 0.0, %v149
  %v151 = vpop.f32.mrb[0].mxu0
  %152 = vmatprep.mubr.f32.mxu0 0.0
  %153 = vmatmul.mubr.f32.gmra.mrb[0].mxu0 %v55
  %v154 = vpop.f32.mrb[0].mxu0
  %v155 = vadd.f32 0.0, %v154
  %v156 = vpop.f32.mrb[0].mxu0
  %157 = vdwg.mxu0
  %158 = vmatprep.subr.mxu0 0.0
  %159 = vmatpush1.msra.mxu0 %v36
  %160 = vmatprep.subr.mxu0 0.0
  %161 = vmatpush1.msra.mxu0 %v37
  %162 = vmatprep.subr.mxu0 0.0
  %163 = vmatpush1.msra.mxu0 %v38
  %164 = vmatprep.subr.mxu0 0.0
  %165 = vmatpush1.msra.mxu0 %v39
  %166 = vmatprep.subr.mxu0 0.0
  %167 = vmatpush1.msra.mxu0 %v40
  %168 = vmatprep.subr.mxu0 0.0
  %169 = vmatpush1.msra.mxu0 %v41
  %170 = vmatprep.subr.mxu0 0.0
  %171 = vmatpush1.msra.mxu0 %v42
  %172 = vmatprep.subr.mxu0 0.0
  %173 = vmatpush1.msra.mxu0 %v43
  %174 = vmatprep.subr.mxu0 0.0
  %175 = vmatpush1.msra.mxu0 %v44
  %176 = vmatprep.subr.mxu0 0.0
  %177 = vmatpush1.msra.mxu0 %v45
  %178 = vmatprep.subr.mxu0 0.0
  %179 = vmatpush1.msra.mxu0 %v46
  %180 = vmatprep.subr.mxu0 0.0
  %181 = vmatpush1.msra.mxu0 %v47
  %182 = vmatprep.subr.mxu0 0.0
  %183 = vmatpush1.msra.mxu0 %v48
  %184 = vmatprep.subr.mxu0 0.0
  %185 = vmatpush1.msra.mxu0 %v49
  %186 = vmatprep.subr.mxu0 0.0
  %187 = vmatpush1.msra.mxu0 %v50
  %188 = vmatprep.subr.mxu0 0.0
  %189 = vmatpush1.msra.mxu0 %v51
  %190 = vmatprep.subr.mxu0 0.0
  %191 = vmatpush1.msra.mxu0 0.0
  %192 = vmatprep.subr.mxu0 0.0
  %193 = vmatpush1.msra.mxu0 0.0
  %194 = vmatprep.subr.mxu0 0.0
  %195 = vmatpush1.msra.mxu0 0.0
  %196 = vmatprep.subr.mxu0 0.0
  %197 = vmatpush1.msra.mxu0 0.0
  %198 = vmatprep.subr.mxu0 0.0
  %199 = vmatpush1.msra.mxu0 0.0
  %200 = vmatprep.subr.mxu0 0.0
  %201 = vmatpush1.msra.mxu0 0.0
  %202 = vmatprep.subr.mxu0 0.0
  %203 = vmatpush1.msra.mxu0 0.0
  %204 = vmatprep.subr.mxu0 0.0
  %205 = vmatpush1.msra.mxu0 0.0
  %206 = vmatprep.subr.mxu0 0.0
  %207 = vmatpush1.msra.mxu0 0.0
  %208 = vmatprep.subr.mxu0 0.0
  %209 = vmatpush1.msra.mxu0 0.0
  %210 = vmatprep.subr.mxu0 0.0
  %211 = vmatpush1.msra.mxu0 0.0
  %212 = vmatprep.subr.mxu0 0.0
  %213 = vmatpush1.msra.mxu0 0.0
  %214 = vmatprep.subr.mxu0 0.0
  %215 = vmatpush1.msra.mxu0 0.0
  %216 = vmatprep.subr.mxu0 0.0
  %217 = vmatpush1.msra.mxu0 0.0
  %218 = vmatprep.subr.mxu0 0.0
  %219 = vmatpush1.msra.mxu0 0.0
  %220 = vmatprep.subr.mxu0 0.0
  %221 = vmatpush1.msra.mxu0 0.0
  %222 = vmatprep.mubr.f32.mxu0 0.0
  %223 = vmatmul.mubr.f32.gmra.mrb[0].mxu0 %v32
  %v224 = vpop.f32.mrb[0].mxu0
  %v225 = vadd.f32 %v140, %v224
  %v226 = vpop.f32.mrb[0].mxu0
  %227 = vmatprep.mubr.f32.mxu0 0.0
  %228 = vmatmul.mubr.f32.gmra.mrb[0].mxu0 %v33
  %v229 = vpop.f32.mrb[0].mxu0
  %v230 = vadd.f32 %v145, %v229
  %v231 = vpop.f32.mrb[0].mxu0
  %232 = vmatprep.mubr.f32.mxu0 0.0
  %233 = vmatmul.mubr.f32.gmra.mrb[0].mxu0 %v34
  %v234 = vpop.f32.mrb[0].mxu0
  %v235 = vadd.f32 %v150, %v234
  %v236 = vpop.f32.mrb[0].mxu0
  %237 = vmatprep.mubr.f32.mxu0 0.0
  %238 = vmatmul.mubr.f32.gmra.mrb[0].mxu0 %v35
  %v239 = vpop.f32.mrb[0].mxu0
  %v240 = vadd.f32 %v155, %v239
  %v241 = vpop.f32.mrb[0].mxu0
  %242 = vdwg.mxu0
  %v243 = vld [vmem:[#allocation2 + $0x2] sm:$0xff]
  %v244 = vld [vmem:[#allocation2 + $0xa] sm:$0xff]
  %v245 = vld [vmem:[#allocation2 + $0x1a] sm:$0xff]
  %v246 = vld [vmem:[#allocation2 + $0x22] sm:$0xff]
  %s247 = scalar_lea.vmem %s1, 256
  %v248 = vld [vmem:[%s247] sm:$0xff]
  %v249 = vld [vmem:[%s247 + $0x8] sm:$0xff]
  %v250 = vld [vmem:[%s247 + $0x10] sm:$0xff]
  %v251 = vld [vmem:[%s247 + $0x18] sm:$0xff]
  %v252 = vld [vmem:[%s247 + $0x20] sm:$0xff]
  %v253 = vld [vmem:[%s247 + $0x28] sm:$0xff]
  %v254 = vld [vmem:[%s247 + $0x30] sm:$0xff]
  %v255 = vld [vmem:[%s247 + $0x38] sm:$0xff]
  %v256 = vld [vmem:[%s247 + $0x40] sm:$0xff]
  %v257 = vld [vmem:[%s247 + $0x48] sm:$0xff]
  %v258 = vld [vmem:[%s247 + $0x50] sm:$0xff]
  %v259 = vld [vmem:[%s247 + $0x58] sm:$0xff]
  %v260 = vld [vmem:[%s247 + $0x60] sm:$0xff]
  %v261 = vld [vmem:[%s247 + $0x68] sm:$0xff]
  %v262 = vld [vmem:[%s247 + $0x70] sm:$0xff]
  %v263 = vld [vmem:[%s247 + $0x78] sm:$0xff]
  %264 = vmatprep.subr.mxu0 0.0
  %265 = vmatpush1.msra.mxu0 %v248
  %266 = vmatprep.subr.mxu0 0.0
  %267 = vmatpush1.msra.mxu0 %v249
  %268 = vmatprep.subr.mxu0 0.0
  %269 = vmatpush1.msra.mxu0 %v250
  %270 = vmatprep.subr.mxu0 0.0
  %271 = vmatpush1.msra.mxu0 %v251
  %272 = vmatprep.subr.mxu0 0.0
  %273 = vmatpush1.msra.mxu0 %v252
  %274 = vmatprep.subr.mxu0 0.0
  %275 = vmatpush1.msra.mxu0 %v253
  %276 = vmatprep.subr.mxu0 0.0
  %277 = vmatpush1.msra.mxu0 %v254
  %278 = vmatprep.subr.mxu0 0.0
  %279 = vmatpush1.msra.mxu0 %v255
  %280 = vmatprep.subr.mxu0 0.0
  %281 = vmatpush1.msra.mxu0 %v256
  %282 = vmatprep.subr.mxu0 0.0
  %283 = vmatpush1.msra.mxu0 %v257
  %284 = vmatprep.subr.mxu0 0.0
  %285 = vmatpush1.msra.mxu0 %v258
  %286 = vmatprep.subr.mxu0 0.0
  %287 = vmatpush1.msra.mxu0 %v259
  %288 = vmatprep.subr.mxu0 0.0
  %289 = vmatpush1.msra.mxu0 %v260
  %290 = vmatprep.subr.mxu0 0.0
  %291 = vmatpush1.msra.mxu0 %v261
  %292 = vmatprep.subr.mxu0 0.0
  %293 = vmatpush1.msra.mxu0 %v262
  %294 = vmatprep.subr.mxu0 0.0
  %295 = vmatpush1.msra.mxu0 %v263
  %296 = vmatprep.subr.mxu0 0.0
  %297 = vmatpush1.msra.mxu0 0.0
  %298 = vmatprep.subr.mxu0 0.0
  %299 = vmatpush1.msra.mxu0 0.0
  %300 = vmatprep.subr.mxu0 0.0
  %301 = vmatpush1.msra.mxu0 0.0
  %302 = vmatprep.subr.mxu0 0.0
  %303 = vmatpush1.msra.mxu0 0.0
  %304 = vmatprep.subr.mxu0 0.0
  %305 = vmatpush1.msra.mxu0 0.0
  %306 = vmatprep.subr.mxu0 0.0
  %307 = vmatpush1.msra.mxu0 0.0
  %308 = vmatprep.subr.mxu0 0.0
  %309 = vmatpush1.msra.mxu0 0.0
  %310 = vmatprep.subr.mxu0 0.0
  %311 = vmatpush1.msra.mxu0 0.0
  %312 = vmatprep.subr.mxu0 0.0
  %313 = vmatpush1.msra.mxu0 0.0
  %314 = vmatprep.subr.mxu0 0.0
  %315 = vmatpush1.msra.mxu0 0.0
  %316 = vmatprep.subr.mxu0 0.0
  %317 = vmatpush1.msra.mxu0 0.0
  %318 = vmatprep.subr.mxu0 0.0
  %319 = vmatpush1.msra.mxu0 0.0
  %320 = vmatprep.subr.mxu0 0.0
  %321 = vmatpush1.msra.mxu0 0.0
  %322 = vmatprep.subr.mxu0 0.0
  %323 = vmatpush1.msra.mxu0 0.0
  %324 = vmatprep.subr.mxu0 0.0
  %325 = vmatpush1.msra.mxu0 0.0
  %326 = vmatprep.subr.mxu0 0.0
  %327 = vmatpush1.msra.mxu0 0.0
  %328 = vmatprep.mubr.f32.mxu0 0.0
  %329 = vmatmul.mubr.f32.gmra.mrb[0].mxu0 %v243
  %v330 = vpop.f32.mrb[0].mxu0
  %v331 = vadd.f32 0.0, %v330
  %v332 = vpop.f32.mrb[0].mxu0
  %333 = vmatprep.mubr.f32.mxu0 0.0
  %334 = vmatmul.mubr.f32.gmra.mrb[0].mxu0 %v244
  %v335 = vpop.f32.mrb[0].mxu0
  %v336 = vadd.f32 0.0, %v335
  %v337 = vpop.f32.mrb[0].mxu0
  %338 = vmatprep.mubr.f32.mxu0 0.0
  %339 = vmatmul.mubr.f32.gmra.mrb[0].mxu0 %v245
  %v340 = vpop.f32.mrb[0].mxu0
  %v341 = vadd.f32 0.0, %v340
  %v342 = vpop.f32.mrb[0].mxu0
  %343 = vmatprep.mubr.f32.mxu0 0.0
  %344 = vmatmul.mubr.f32.gmra.mrb[0].mxu0 %v246
  %v345 = vpop.f32.mrb[0].mxu0
  %v346 = vadd.f32 0.0, %v345
  %v347 = vpop.f32.mrb[0].mxu0
  %348 = vdwg.mxu0
  %v349 = vadd.f32 %v225, %v331
  %v350 = vadd.f32 %v230, %v336
  %v351 = vadd.f32 %v235, %v341
  %v352 = vadd.f32 %v240, %v346
  %v353 = vld [vmem:[%s2] sm:$0x1]
  %v355 = vlaneseq
  %v356 = vshrl.u32 %v355, 7
  %v357 = vsub.s32 0, %v356
  %v358 = vrot.slane %v353, %v357
  %v360 = vadd.f32 %v349, %v358
  %v361 = vadd.f32 %v350, %v358
  %v362 = vadd.f32 %v351, %v358
  %v363 = vadd.f32 %v352, %v358
  %v364 = vmax.f32 %v360, 0.0
  %v365 = vmax.f32 %v361, 0.0
  %v366 = vmax.f32 %v362, 0.0
  %v367 = vmax.f32 %v363, 0.0
  %368 = vst [vmem:[#allocation2 + $0x1] sm:$0xff] %v364
  %369 = vst [vmem:[#allocation2 + $0x9] sm:$0xff] %v365
  %370 = vst [vmem:[#allocation2 + $0x19] sm:$0xff] %v366
  %371 = vst [vmem:[#allocation2 + $0x21] sm:$0xff] %v367
  %v372 = vld [vmem:[#allocation2] sm:$0xff]
  %v373 = vld [vmem:[#allocation2 + $0x8] sm:$0xff]
  %v374 = vld [vmem:[#allocation2 + $0x18] sm:$0xff]
  %v375 = vld [vmem:[#allocation2 + $0x20] sm:$0xff]
  %v376 = vld [vmem:[%s3] sm:$0xff]
  %v377 = vld [vmem:[%s3 + $0x8] sm:$0xff]
  %v378 = vld [vmem:[%s3 + $0x10] sm:$0xff]
  %v379 = vld [vmem:[%s3 + $0x18] sm:$0xff]
  %v380 = vld [vmem:[%s3 + $0x20] sm:$0xff]
  %v381 = vld [vmem:[%s3 + $0x28] sm:$0xff]
  %v382 = vld [vmem:[%s3 + $0x30] sm:$0xff]
  %v383 = vld [vmem:[%s3 + $0x38] sm:$0xff]
  %v384 = vld [vmem:[%s3 + $0x40] sm:$0xff]
  %v385 = vld [vmem:[%s3 + $0x48] sm:$0xff]
  %v386 = vld [vmem:[%s3 + $0x50] sm:$0xff]
  %v387 = vld [vmem:[%s3 + $0x58] sm:$0xff]
  %v388 = vld [vmem:[%s3 + $0x60] sm:$0xff]
  %v389 = vld [vmem:[%s3 + $0x68] sm:$0xff]
  %v390 = vld [vmem:[%s3 + $0x70] sm:$0xff]
  %v391 = vld [vmem:[%s3 + $0x78] sm:$0xff]
  %v392 = vld [vmem:[#allocation2 + $0x1] sm:$0xff]
  %v393 = vld [vmem:[#allocation2 + $0x9] sm:$0xff]
  %v394 = vld [vmem:[#allocation2 + $0x19] sm:$0xff]
  %v395 = vld [vmem:[#allocation2 + $0x21] sm:$0xff]
  %s396 = scalar_lea.vmem %s3, 128
  %v397 = vld [vmem:[%s396] sm:$0xff]
  %v398 = vld [vmem:[%s396 + $0x8] sm:$0xff]
  %v399 = vld [vmem:[%s396 + $0x10] sm:$0xff]
  %v400 = vld [vmem:[%s396 + $0x18] sm:$0xff]
  %v401 = vld [vmem:[%s396 + $0x20] sm:$0xff]
  %v402 = vld [vmem:[%s396 + $0x28] sm:$0xff]
  %v403 = vld [vmem:[%s396 + $0x30] sm:$0xff]
  %v404 = vld [vmem:[%s396 + $0x38] sm:$0xff]
  %v405 = vld [vmem:[%s396 + $0x40] sm:$0xff]
  %v406 = vld [vmem:[%s396 + $0x48] sm:$0xff]
  %v407 = vld [vmem:[%s396 + $0x50] sm:$0xff]
  %v408 = vld [vmem:[%s396 + $0x58] sm:$0xff]
  %v409 = vld [vmem:[%s396 + $0x60] sm:$0xff]
  %v410 = vld [vmem:[%s396 + $0x68] sm:$0xff]
  %v411 = vld [vmem:[%s396 + $0x70] sm:$0xff]
  %v412 = vld [vmem:[%s396 + $0x78] sm:$0xff]
  %413 = vmatprep.subr.mxu0 0.0
  %414 = vmatpush1.msra.mxu0 %v397
  %415 = vmatprep.subr.mxu0 0.0
  %416 = vmatpush1.msra.mxu0 %v398
  %417 = vmatprep.subr.mxu0 0.0
  %418 = vmatpush1.msra.mxu0 %v399
  %419 = vmatprep.subr.mxu0 0.0
  %420 = vmatpush1.msra.mxu0 %v400
  %421 = vmatprep.subr.mxu0 0.0
  %422 = vmatpush1.msra.mxu0 %v401
  %423 = vmatprep.subr.mxu0 0.0
  %424 = vmatpush1.msra.mxu0 %v402
  %425 = vmatprep.subr.mxu0 0.0
  %426 = vmatpush1.msra.mxu0 %v403
  %427 = vmatprep.subr.mxu0 0.0
  %428 = vmatpush1.msra.mxu0 %v404
  %429 = vmatprep.subr.mxu0 0.0
  %430 = vmatpush1.msra.mxu0 %v405
  %431 = vmatprep.subr.mxu0 0.0
  %432 = vmatpush1.msra.mxu0 %v406
  %433 = vmatprep.subr.mxu0 0.0
  %434 = vmatpush1.msra.mxu0 %v407
  %435 = vmatprep.subr.mxu0 0.0
  %436 = vmatpush1.msra.mxu0 %v408
  %437 = vmatprep.subr.mxu0 0.0
  %438 = vmatpush1.msra.mxu0 %v409
  %439 = vmatprep.subr.mxu0 0.0
  %440 = vmatpush1.msra.mxu0 %v410
  %441 = vmatprep.subr.mxu0 0.0
  %442 = vmatpush1.msra.mxu0 %v411
  %443 = vmatprep.subr.mxu0 0.0
  %444 = vmatpush1.msra.mxu0 %v412
  %445 = vmatprep.subr.mxu0 0.0
  %446 = vmatpush1.msra.mxu0 0.0
  %447 = vmatprep.subr.mxu0 0.0
  %448 = vmatpush1.msra.mxu0 0.0
  %449 = vmatprep.subr.mxu0 0.0
  %450 = vmatpush1.msra.mxu0 0.0
  %451 = vmatprep.subr.mxu0 0.0
  %452 = vmatpush1.msra.mxu0 0.0
  %453 = vmatprep.subr.mxu0 0.0
  %454 = vmatpush1.msra.mxu0 0.0
  %455 = vmatprep.subr.mxu0 0.0
  %456 = vmatpush1.msra.mxu0 0.0
  %457 = vmatprep.subr.mxu0 0.0
  %458 = vmatpush1.msra.mxu0 0.0
  %459 = vmatprep.subr.mxu0 0.0
  %460 = vmatpush1.msra.mxu0 0.0
  %461 = vmatprep.subr.mxu0 0.0
  %462 = vmatpush1.msra.mxu0 0.0
  %463 = vmatprep.subr.mxu0 0.0
  %464 = vmatpush1.msra.mxu0 0.0
  %465 = vmatprep.subr.mxu0 0.0
  %466 = vmatpush1.msra.mxu0 0.0
  %467 = vmatprep.subr.mxu0 0.0
  %468 = vmatpush1.msra.mxu0 0.0
  %469 = vmatprep.subr.mxu0 0.0
  %470 = vmatpush1.msra.mxu0 0.0
  %471 = vmatprep.subr.mxu0 0.0
  %472 = vmatpush1.msra.mxu0 0.0
  %473 = vmatprep.subr.mxu0 0.0
  %474 = vmatpush1.msra.mxu0 0.0
  %475 = vmatprep.subr.mxu0 0.0
  %476 = vmatpush1.msra.mxu0 0.0
  %477 = vmatprep.mubr.f32.mxu0 0.0
  %478 = vmatmul.mubr.f32.gmra.mrb[0].mxu0 %v392
  %v479 = vpop.f32.mrb[0].mxu0
  %v480 = vadd.f32 0.0, %v479
  %v481 = vpop.f32.mrb[0].mxu0
  %482 = vmatprep.mubr.f32.mxu0 0.0
  %483 = vmatmul.mubr.f32.gmra.mrb[0].mxu0 %v393
  %v484 = vpop.f32.mrb[0].mxu0
  %v485 = vadd.f32 0.0, %v484
  %v486 = vpop.f32.mrb[0].mxu0
  %487 = vmatprep.mubr.f32.mxu0 0.0
  %488 = vmatmul.mubr.f32.gmra.mrb[0].mxu0 %v394
  %v489 = vpop.f32.mrb[0].mxu0
  %v490 = vadd.f32 0.0, %v489
  %v491 = vpop.f32.mrb[0].mxu0
  %492 = vmatprep.mubr.f32.mxu0 0.0
  %493 = vmatmul.mubr.f32.gmra.mrb[0].mxu0 %v395
  %v494 = vpop.f32.mrb[0].mxu0
  %v495 = vadd.f32 0.0, %v494
  %v496 = vpop.f32.mrb[0].mxu0
  %497 = vdwg.mxu0
  %498 = vmatprep.subr.mxu0 0.0
  %499 = vmatpush1.msra.mxu0 %v376
  %500 = vmatprep.subr.mxu0 0.0
  %501 = vmatpush1.msra.mxu0 %v377
  %502 = vmatprep.subr.mxu0 0.0
  %503 = vmatpush1.msra.mxu0 %v378
  %504 = vmatprep.subr.mxu0 0.0
  %505 = vmatpush1.msra.mxu0 %v379
  %506 = vmatprep.subr.mxu0 0.0
  %507 = vmatpush1.msra.mxu0 %v380
  %508 = vmatprep.subr.mxu0 0.0
  %509 = vmatpush1.msra.mxu0 %v381
  %510 = vmatprep.subr.mxu0 0.0
  %511 = vmatpush1.msra.mxu0 %v382
  %512 = vmatprep.subr.mxu0 0.0
  %513 = vmatpush1.msra.mxu0 %v383
  %514 = vmatprep.subr.mxu0 0.0
  %515 = vmatpush1.msra.mxu0 %v384
  %516 = vmatprep.subr.mxu0 0.0
  %517 = vmatpush1.msra.mxu0 %v385
  %518 = vmatprep.subr.mxu0 0.0
  %519 = vmatpush1.msra.mxu0 %v386
  %520 = vmatprep.subr.mxu0 0.0
  %521 = vmatpush1.msra.mxu0 %v387
  %522 = vmatprep.subr.mxu0 0.0
  %523 = vmatpush1.msra.mxu0 %v388
  %524 = vmatprep.subr.mxu0 0.0
  %525 = vmatpush1.msra.mxu0 %v389
  %526 = vmatprep.subr.mxu0 0.0
  %527 = vmatpush1.msra.mxu0 %v390
  %528 = vmatprep.subr.mxu0 0.0
  %529 = vmatpush1.msra.mxu0 %v391
  %530 = vmatprep.subr.mxu0 0.0
  %531 = vmatpush1.msra.mxu0 0.0
  %532 = vmatprep.subr.mxu0 0.0
  %533 = vmatpush1.msra.mxu0 0.0
  %534 = vmatprep.subr.mxu0 0.0
  %535 = vmatpush1.msra.mxu0 0.0
  %536 = vmatprep.subr.mxu0 0.0
  %537 = vmatpush1.msra.mxu0 0.0
  %538 = vmatprep.subr.mxu0 0.0
  %539 = vmatpush1.msra.mxu0 0.0
  %540 = vmatprep.subr.mxu0 0.0
  %541 = vmatpush1.msra.mxu0 0.0
  %542 = vmatprep.subr.mxu0 0.0
  %543 = vmatpush1.msra.mxu0 0.0
  %544 = vmatprep.subr.mxu0 0.0
  %545 = vmatpush1.msra.mxu0 0.0
  %546 = vmatprep.subr.mxu0 0.0
  %547 = vmatpush1.msra.mxu0 0.0
  %548 = vmatprep.subr.mxu0 0.0
  %549 = vmatpush1.msra.mxu0 0.0
  %550 = vmatprep.subr.mxu0 0.0
  %551 = vmatpush1.msra.mxu0 0.0
  %552 = vmatprep.subr.mxu0 0.0
  %553 = vmatpush1.msra.mxu0 0.0
  %554 = vmatprep.subr.mxu0 0.0
  %555 = vmatpush1.msra.mxu0 0.0
  %556 = vmatprep.subr.mxu0 0.0
  %557 = vmatpush1.msra.mxu0 0.0
  %558 = vmatprep.subr.mxu0 0.0
  %559 = vmatpush1.msra.mxu0 0.0
  %560 = vmatprep.subr.mxu0 0.0
  %561 = vmatpush1.msra.mxu0 0.0
  %562 = vmatprep.mubr.f32.mxu0 0.0
  %563 = vmatmul.mubr.f32.gmra.mrb[0].mxu0 %v372
  %v564 = vpop.f32.mrb[0].mxu0
  %v565 = vadd.f32 %v480, %v564
  %v566 = vpop.f32.mrb[0].mxu0
  %567 = vmatprep.mubr.f32.mxu0 0.0
  %568 = vmatmul.mubr.f32.gmra.mrb[0].mxu0 %v373
  %v569 = vpop.f32.mrb[0].mxu0
  %v570 = vadd.f32 %v485, %v569
  %v571 = vpop.f32.mrb[0].mxu0
  %572 = vmatprep.mubr.f32.mxu0 0.0
  %573 = vmatmul.mubr.f32.gmra.mrb[0].mxu0 %v374
  %v574 = vpop.f32.mrb[0].mxu0
  %v575 = vadd.f32 %v490, %v574
  %v576 = vpop.f32.mrb[0].mxu0
  %577 = vmatprep.mubr.f32.mxu0 0.0
  %578 = vmatmul.mubr.f32.gmra.mrb[0].mxu0 %v375
  %v579 = vpop.f32.mrb[0].mxu0
  %v580 = vadd.f32 %v495, %v579
  %v581 = vpop.f32.mrb[0].mxu0
  %582 = vdwg.mxu0
  %v583 = vld [vmem:[#allocation2 + $0x2] sm:$0xff]
  %v584 = vld [vmem:[#allocation2 + $0xa] sm:$0xff]
  %v585 = vld [vmem:[#allocation2 + $0x1a] sm:$0xff]
  %v586 = vld [vmem:[#allocation2 + $0x22] sm:$0xff]
  %s587 = scalar_lea.vmem %s3, 256
  %v588 = vld [vmem:[%s587] sm:$0xff]
  %v589 = vld [vmem:[%s587 + $0x8] sm:$0xff]
  %v590 = vld [vmem:[%s587 + $0x10] sm:$0xff]
  %v591 = vld [vmem:[%s587 + $0x18] sm:$0xff]
  %v592 = vld [vmem:[%s587 + $0x20] sm:$0xff]
  %v593 = vld [vmem:[%s587 + $0x28] sm:$0xff]
  %v594 = vld [vmem:[%s587 + $0x30] sm:$0xff]
  %v595 = vld [vmem:[%s587 + $0x38] sm:$0xff]
  %v596 = vld [vmem:[%s587 + $0x40] sm:$0xff]
  %v597 = vld [vmem:[%s587 + $0x48] sm:$0xff]
  %v598 = vld [vmem:[%s587 + $0x50] sm:$0xff]
  %v599 = vld [vmem:[%s587 + $0x58] sm:$0xff]
  %v600 = vld [vmem:[%s587 + $0x60] sm:$0xff]
  %v601 = vld [vmem:[%s587 + $0x68] sm:$0xff]
  %v602 = vld [vmem:[%s587 + $0x70] sm:$0xff]
  %v603 = vld [vmem:[%s587 + $0x78] sm:$0xff]
  %604 = vmatprep.subr.mxu0 0.0
  %605 = vmatpush1.msra.mxu0 %v588
  %606 = vmatprep.subr.mxu0 0.0
  %607 = vmatpush1.msra.mxu0 %v589
  %608 = vmatprep.subr.mxu0 0.0
  %609 = vmatpush1.msra.mxu0 %v590
  %610 = vmatprep.subr.mxu0 0.0
  %611 = vmatpush1.msra.mxu0 %v591
  %612 = vmatprep.subr.mxu0 0.0
  %613 = vmatpush1.msra.mxu0 %v592
  %614 = vmatprep.subr.mxu0 0.0
  %615 = vmatpush1.msra.mxu0 %v593
  %616 = vmatprep.subr.mxu0 0.0
  %617 = vmatpush1.msra.mxu0 %v594
  %618 = vmatprep.subr.mxu0 0.0
  %619 = vmatpush1.msra.mxu0 %v595
  %620 = vmatprep.subr.mxu0 0.0
  %621 = vmatpush1.msra.mxu0 %v596
  %622 = vmatprep.subr.mxu0 0.0
  %623 = vmatpush1.msra.mxu0 %v597
  %624 = vmatprep.subr.mxu0 0.0
  %625 = vmatpush1.msra.mxu0 %v598
  %626 = vmatprep.subr.mxu0 0.0
  %627 = vmatpush1.msra.mxu0 %v599
  %628 = vmatprep.subr.mxu0 0.0
  %629 = vmatpush1.msra.mxu0 %v600
  %630 = vmatprep.subr.mxu0 0.0
  %631 = vmatpush1.msra.mxu0 %v601
  %632 = vmatprep.subr.mxu0 0.0
  %633 = vmatpush1.msra.mxu0 %v602
  %634 = vmatprep.subr.mxu0 0.0
  %635 = vmatpush1.msra.mxu0 %v603
  %636 = vmatprep.subr.mxu0 0.0
  %637 = vmatpush1.msra.mxu0 0.0
  %638 = vmatprep.subr.mxu0 0.0
  %639 = vmatpush1.msra.mxu0 0.0
  %640 = vmatprep.subr.mxu0 0.0
  %641 = vmatpush1.msra.mxu0 0.0
  %642 = vmatprep.subr.mxu0 0.0
  %643 = vmatpush1.msra.mxu0 0.0
  %644 = vmatprep.subr.mxu0 0.0
  %645 = vmatpush1.msra.mxu0 0.0
  %646 = vmatprep.subr.mxu0 0.0
  %647 = vmatpush1.msra.mxu0 0.0
  %648 = vmatprep.subr.mxu0 0.0
  %649 = vmatpush1.msra.mxu0 0.0
  %650 = vmatprep.subr.mxu0 0.0
  %651 = vmatpush1.msra.mxu0 0.0
  %652 = vmatprep.subr.mxu0 0.0
  %653 = vmatpush1.msra.mxu0 0.0
  %654 = vmatprep.subr.mxu0 0.0
  %655 = vmatpush1.msra.mxu0 0.0
  %656 = vmatprep.subr.mxu0 0.0
  %657 = vmatpush1.msra.mxu0 0.0
  %658 = vmatprep.subr.mxu0 0.0
  %659 = vmatpush1.msra.mxu0 0.0
  %660 = vmatprep.subr.mxu0 0.0
  %661 = vmatpush1.msra.mxu0 0.0
  %662 = vmatprep.subr.mxu0 0.0
  %663 = vmatpush1.msra.mxu0 0.0
  %664 = vmatprep.subr.mxu0 0.0
  %665 = vmatpush1.msra.mxu0 0.0
  %666 = vmatprep.subr.mxu0 0.0
  %667 = vmatpush1.msra.mxu0 0.0
  %668 = vmatprep.mubr.f32.mxu0 0.0
  %669 = vmatmul.mubr.f32.gmra.mrb[0].mxu0 %v583
  %v670 = vpop.f32.mrb[0].mxu0
  %v671 = vadd.f32 0.0, %v670
  %v672 = vpop.f32.mrb[0].mxu0
  %673 = vmatprep.mubr.f32.mxu0 0.0
  %674 = vmatmul.mubr.f32.gmra.mrb[0].mxu0 %v584
  %v675 = vpop.f32.mrb[0].mxu0
  %v676 = vadd.f32 0.0, %v675
  %v677 = vpop.f32.mrb[0].mxu0
  %678 = vmatprep.mubr.f32.mxu0 0.0
  %679 = vmatmul.mubr.f32.gmra.mrb[0].mxu0 %v585
  %v680 = vpop.f32.mrb[0].mxu0
  %v681 = vadd.f32 0.0, %v680
  %v682 = vpop.f32.mrb[0].mxu0
  %683 = vmatprep.mubr.f32.mxu0 0.0
  %684 = vmatmul.mubr.f32.gmra.mrb[0].mxu0 %v586
  %v685 = vpop.f32.mrb[0].mxu0
  %v686 = vadd.f32 0.0, %v685
  %v687 = vpop.f32.mrb[0].mxu0
  %688 = vdwg.mxu0
  %v689 = vadd.f32 %v565, %v671
  %v690 = vadd.f32 %v570, %v676
  %v691 = vadd.f32 %v575, %v681
  %v692 = vadd.f32 %v580, %v686
  %v693 = vld [vmem:[%s4] sm:$0x1]
  %v695 = vlaneseq
  %v696 = vshrl.u32 %v695, 7
  %v697 = vsub.s32 0, %v696
  %v698 = vrot.slane %v693, %v697
  %v700 = vadd.f32 %v689, %v698
  %v701 = vadd.f32 %v690, %v698
  %v702 = vadd.f32 %v691, %v698
  %v703 = vadd.f32 %v692, %v698
  %v704 = vadd.f32 %v20, %v700
  %v705 = vadd.f32 %v21, %v701
  %v706 = vadd.f32 %v22, %v702
  %v707 = vadd.f32 %v23, %v703
  %v708 = vmax.f32 %v704, 0.0
  %v709 = vmax.f32 %v705, 0.0
  %v710 = vmax.f32 %v706, 0.0
  %v711 = vmax.f32 %v707, 0.0
  %712 = vst [vmem:[%s5] sm:$0xff] %v708
  %713 = vst [vmem:[%s5 + $0x8] sm:$0xff] %v709
  %714 = vst [vmem:[%s5 + $0x10] sm:$0xff] %v710
  %715 = vst [vmem:[%s5 + $0x18] sm:$0xff] %v711
  // Predicated region
  $region22: #{resblock_forward.1} parent=0 // pred_check
    _
  $region23: #{resblock_forward.1} parent=0 // pred_check_branch
    %717 = sbr.rel (0) target = $region25
  $region24: #{resblock_forward.1} parent=0 // pred_region
    _
  $region25: #{resblock_forward.1} parent=0 // pred_fallthru
    _
  // Predicated region
  $region26: #{resblock_forward.1} parent=0 // pred_check
    _
  $region27: #{resblock_forward.1} parent=0 // pred_check_branch
    %719 = sbr.rel (0) target = $region29
  $region28: #{resblock_forward.1} parent=0 // pred_region
    _
  $region29: #{resblock_forward.1} parent=0 // pred_fallthru
    _

</llo_original>
